<compile_context>
chip_gen: v6e
topology: v6e:2x2x1
jax: 0.10.0
libtpu: 0.0.40
codegen_flags: <defaults>
</compile_context>

<pallas_src>
from typing import NamedTuple, Tuple

import jax
import jax.numpy as jnp
from jax.experimental import pallas as pl
from jax.experimental.pallas import tpu as pltpu


def _round_up(a: int, b: int) -> int:
    return (a + b - 1) // b * b


def _cdiv(a: int, b: int) -> int:
    return (a + b - 1) // b


# ---------------------------------------------------------------------------
# Kernel body: one (tm, tn) output tile = (tm, K) @ (K, tn) + bias row.
# ---------------------------------------------------------------------------
def _patch_embed_kernel(a_ref, w_ref, b_ref, o_ref):
    a = a_ref[...]
    w = w_ref[...]
    if a.dtype != w.dtype:
        # Cast activations to the matmul dtype inside the kernel (cheap VPU op)
        # so the wrapper does not add an extra HBM pass over the video.
        a = a.astype(w.dtype)
    acc = jnp.dot(a, w, preferred_element_type=jnp.float32)   # MXU, f32 accumulation
    o_ref[...] = (acc + b_ref[...]).astype(o_ref.dtype)       # bias added in f32


# ---------------------------------------------------------------------------
# One-time parameter expansion (hoisted out of the per-call path).
# ---------------------------------------------------------------------------
class PatchEmbedParams(NamedTuple):
    wbig: jax.Array                # (ph*W, N_pad) block-diagonal projection matrix
    bias2d: jax.Array              # (1, N_pad) float32
    patch_size: Tuple[int, int]
    embed_dim: int
    n_valid: int                   # Wp * E (valid columns before lane padding)


def build_patch_embed_params(weight, bias, patch_size, img_w,
                             compute_dtype=jnp.bfloat16) -> PatchEmbedParams:
    """Expand the Conv3d weight into the block-diagonal matmul operand.

    Call once per (weight, patch_size, img_w) and reuse: re-materializing the
    (K, N) matrix every forward call costs an avoidable HBM round trip.
    """
    ph, pw = patch_size
    E = weight.shape[0]
    assert weight.shape == (E, 1, 1, ph, pw)
    assert img_w % pw == 0
    Wp = img_w // pw
    K = ph * img_w
    N = Wp * E
    # Lane-density guard: pad N up to a multiple of 128 so output stores are
    # full-width (unmasked vst); the wrapper slices the padding back off.
    N_pad = _round_up(max(N, 128), 128)

    wt = weight.reshape(E, ph, pw).transpose(1, 2, 0)             # (ph, pw, E)
    eye = jnp.eye(Wp, dtype=wt.dtype)
    wbig = jnp.einsum('rce,uv->rucve', wt, eye).reshape(K, N)     # (ph*W, Wp*E)
    bias2d = jnp.tile(bias, Wp).reshape(1, N)                     # [0, wp*E+e] = bias[e]
    if N_pad != N:
        wbig = jnp.pad(wbig, ((0, 0), (0, N_pad - N)))
        bias2d = jnp.pad(bias2d, ((0, 0), (0, N_pad - N)))

    wbig = wbig.astype(compute_dtype)       # bf16 by default: halves weight HBM read,
    bias2d = bias2d.astype(jnp.float32)     # keeps MXU at its fast (bf16) rate
    return PatchEmbedParams(wbig, bias2d, (ph, pw), E, N)


# ---------------------------------------------------------------------------
# Generation-aware VMEM budgeting and tile selection.
# ---------------------------------------------------------------------------
def _vmem_capacity_and_budget():
    cap = 64 * 1024 * 1024          # conservative fallback: v7x per-TensorCore VMEM
    try:
        info = pltpu.get_tpu_info()
        for attr in ("vmem_capacity_bytes", "vmem_bytes"):
            v = getattr(info, attr, None)
            if v:
                cap = int(v)
                break
    except Exception:
        pass
    # ~65% of physical VMEM for pipeline blocks: ~83 MiB on v5e/v6e (128 MiB),
    # ~41 MiB on v7x (64 MiB / TensorCore), leaving headroom for Mosaic scratch.
    return cap, int(cap * 0.65)


def _choose_tiles(Mr, K, N_pad, a_item, w_item, out_item, budget, tm_req, tn_target):
    K_sub = _round_up(K, 8)          # weight-block rows, sublane-padded
    K_lane = _round_up(K, 128)       # A-block cols, lane-padded
    tn_target = max(128, _round_up(tn_target, 128))

    # tn: a multiple of 128 that divides N_pad (no masked edge columns), capped
    # so the weight block (x its actual buffer count) uses <= half the budget.
    q = N_pad // 128
    tn = 128
    for k in range(1, q + 1):
        if q % k:
            continue
        cand = 128 * k
        if cand > tn_target:
            continue
        w_buf_c = 1 if cand == N_pad else 2      # Buffered(1) only when resident
        if w_buf_c * K_sub * cand * w_item <= budget // 2 and cand > tn:
            tn = cand
    grid_n = N_pad // tn
    w_buf = 1 if grid_n == 1 else 2              # estimator matches pipeline mode
    w_bytes = w_buf * K_sub * tn * w_item
    b_bytes = w_buf * 8 * tn * 4                 # bias row, 8-sublane padded, f32

    # tm: as large as the budget allows, multiple of 8, capped at ceil(Mr/2) so
    # grid_m >= 2 and both v7x TensorCores get work.
    tm_cap = max(8, _round_up(_cdiv(Mr, 2), 8))
    tm = max(8, min(_round_up(tm_req, 8), tm_cap))

    def footprint(tm_v, a_buf):
        return (a_buf * tm_v * K_lane * a_item     # A blocks
                + 2 * tm_v * tn * out_item         # output blocks (double-buffered)
                + w_bytes + b_bytes)

    while tm > 8 and footprint(tm, 2) > budget:
        tm = max(8, _round_up(tm // 2, 8))

    grid_m = _cdiv(Mr, tm)
    # Third A buffer only when A changes every grid step (grid_n == 1) and
    # there is spare VMEM: hides per-step DMA issue latency when mem-bound.
    a_buf = 3 if (grid_n == 1 and grid_m >= 3 and footprint(tm, 3) <= budget) else 2
    return tm, tn, grid_m, grid_n, a_buf, w_buf, footprint(tm, a_buf)


# ---------------------------------------------------------------------------
# Forward pass.
# ---------------------------------------------------------------------------
def factorized_patch_embed(x, params: PatchEmbedParams, *,
                           tm=1024, tn_target=2048, out_dtype=None):
    """x: (B, 1, T, H, W) -> (B, T, Hp*Wp, E), matching the PyTorch module."""
    ph, pw = params.patch_size
    E, N, N_pad = params.embed_dim, params.n_valid, params.wbig.shape[1]
    B, C, T, H, W = x.shape
    assert C == 1
    assert H % ph == 0 and W % pw == 0
    Hp, Wp = H // ph, W // pw
    assert Wp * E == N and params.wbig.shape[0] == ph * W

    Mr = B * T * Hp                  # one matmul row per horizontal strip of patches
    K = ph * W                       # contraction depth
    out_dtype = x.dtype if out_dtype is None else out_dtype

    # Free reshape: each row of A holds the ph x W pixels feeding one strip of
    # Wp output patches (no transpose, no extra HBM pass over the video).
    a = x.reshape(Mr, K)

    cap, budget = _vmem_capacity_and_budget()
    tm_eff, tn, grid_m, grid_n, a_buf, w_buf, fp = _choose_tiles(
        Mr, K, N_pad,
        jnp.dtype(a.dtype).itemsize, jnp.dtype(params.wbig.dtype).itemsize,
        jnp.dtype(out_dtype).itemsize, budget, tm, tn_target)

    # Explicit scoped-VMEM ceiling: computed footprint + headroom (otherwise the
    # default scoped limit — 16 MiB v5e, 32 MiB v6e/v7x — is the real cap).
    vmem_limit = int(max(32 << 20, min(cap - (4 << 20), fp + (4 << 20))))

    def spec(block_shape, index_map, bufs):
        if bufs is None:
            return pl.BlockSpec(block_shape, index_map)
        return pl.BlockSpec(block_shape, index_map, pipeline_mode=pl.Buffered(bufs))

    def run(use_buffer_hints):
        wb = 1 if (use_buffer_hints and w_buf == 1) else None      # resident weight/bias
        ab = a_buf if (use_buffer_hints and a_buf != 2) else None  # deeper A pipeline
        return pl.pallas_call(
            _patch_embed_kernel,
            out_shape=jax.ShapeDtypeStruct((Mr, N_pad), out_dtype),
            grid=(grid_m, grid_n),
            in_specs=[
                spec((tm_eff, K), lambda i, j: (i, 0), ab),   # A: constant over j
                spec((K, tn),     lambda i, j: (0, j), wb),   # weight column block
                spec((1, tn),     lambda i, j: (0, j), wb),   # bias column block
            ],
            out_specs=pl.BlockSpec((tm_eff, tn), lambda i, j: (i, j)),
            compiler_params=pltpu.CompilerParams(
                dimension_semantics=("parallel", "parallel"),
                vmem_limit_bytes=vmem_limit),
        )(a, params.wbig, params.bias2d)

    try:
        out2d = run(True)
    except Exception:
        # Conservative fallback if pl.Buffered pipeline hints are rejected by
        # the installed Pallas version; identical math, default buffering.
        out2d = run(False)

    if N_pad != N:
        out2d = out2d[:, :N]
    # Free reshape: (Mr, Wp*E) is bit-identical to (B, T, Hp*Wp, E) row-major.
    return out2d.reshape(B, T, Hp * Wp, E)


if __name__ == "__main__":
    # Small, deterministic example consistent with the module's forward.
    B, T, H, W = 2, 4, 16, 16
    patch_size = (4, 4)
    embed_dim = 32
    ph, pw = patch_size
    Hp, Wp = H // ph, W // pw

    key = jax.random.PRNGKey(0)
    kx, kw, kb = jax.random.split(key, 3)
    x = jax.random.normal(kx, (B, 1, T, H, W), dtype=jnp.float32)
    weight = jax.random.normal(kw, (embed_dim, 1, 1, ph, pw), dtype=jnp.float32) * 0.1
    bias = jax.random.normal(kb, (embed_dim,), dtype=jnp.float32) * 0.01

    # Reference: same math as Conv3d + permute/flatten/transpose.
    patches = (x[:, 0].reshape(B, T, Hp, ph, Wp, pw)
               .transpose(0, 1, 2, 4, 3, 5)
               .reshape(B, T, Hp * Wp, ph * pw))
    ref = patches @ weight.reshape(embed_dim, ph * pw).T + bias

    # Exact path (f32 matmul) — validates the kernel math tightly.
    params_f32 = build_patch_embed_params(weight, bias, patch_size, W,
                                          compute_dtype=jnp.float32)
    out_f32 = jax.block_until_ready(factorized_patch_embed(x, params_f32))
    assert out_f32.shape == (B, T, Hp * Wp, embed_dim)
    assert jnp.allclose(out_f32, ref, atol=1e-4, rtol=1e-4), \
        float(jnp.max(jnp.abs(out_f32 - ref)))

    # Default fast path (bf16 operands, f32 MXU accumulation) — looser tolerance.
    params_bf16 = build_patch_embed_params(weight, bias, patch_size, W)
    out_bf16 = jax.block_until_ready(factorized_patch_embed(x, params_bf16))
    assert out_bf16.shape == (B, T, Hp * Wp, embed_dim)
    assert jnp.allclose(out_bf16, ref, atol=5e-2, rtol=5e-2), \
        float(jnp.max(jnp.abs(out_bf16 - ref)))

    print("KERNEL_OK")
</pallas_src>

<mosaic_0001>
module attributes {stable_mosaic.version = 11 : i64} {
  func.func @_patch_embed_kernel(%arg0: i32, %arg1: i32, %arg2: memref<16x64xf32, #tpu.memory_space<vmem>>, %arg3: memref<64x128xf32, #tpu.memory_space<vmem>>, %arg4: memref<1x128xf32, #tpu.memory_space<vmem>>, %arg5: memref<16x128xf32, #tpu.memory_space<vmem>>) attributes {dimension_semantics = [#tpu.dimension_semantics<parallel>, #tpu.dimension_semantics<parallel>], iteration_bounds = array<i64: 2, 1>, scalar_prefetch = 0 : i64, scratch_operands = 0 : i64, tpu.core_type = #tpu.core_type<tc>, window_params = [{transform_indices = @transform_0, window_bounds = array<i64: 16, 64>}, {pipeline_mode = #tpu.pipeline_mode<synchronous>, transform_indices = @transform_1, window_bounds = array<i64: 64, 128>}, {pipeline_mode = #tpu.pipeline_mode<synchronous>, transform_indices = @transform_2, window_bounds = array<i64: 1, 128>}, {transform_indices = @transform_3, window_bounds = array<i64: 16, 128>}]} {
    %c0 = arith.constant 0 : index
    %c0_0 = arith.constant 0 : index
    %0 = vector.load %arg2[%c0, %c0_0] : memref<16x64xf32, #tpu.memory_space<vmem>>, vector<16x64xf32>
    %c0_1 = arith.constant 0 : index
    %c0_2 = arith.constant 0 : index
    %1 = vector.load %arg3[%c0_1, %c0_2] : memref<64x128xf32, #tpu.memory_space<vmem>>, vector<64x128xf32>
    %cst = arith.constant dense<0.000000e+00> : vector<16x128xf32>
    %2 = tpu.matmul %0, %1, %cst {dimension_numbers = #tpu.dot_dimension_numbers<[1], [0], [0], [1], [0, 0, 1, 1], [], []>} : vector<16x64xf32>, vector<64x128xf32>, vector<16x128xf32> -> vector<16x128xf32>
    %c0_3 = arith.constant 0 : index
    %c0_4 = arith.constant 0 : index
    %3 = vector.load %arg4[%c0_3, %c0_4] : memref<1x128xf32, #tpu.memory_space<vmem>>, vector<1x128xf32>
    %4 = vector.broadcast %3 : vector<1x128xf32> to vector<16x128xf32>
    %5 = arith.addf %2, %4 : vector<16x128xf32>
    %c0_5 = arith.constant 0 : index
    %c0_6 = arith.constant 0 : index
    %6 = vector.load %arg5[%c0_5, %c0_6] : memref<16x128xf32, #tpu.memory_space<vmem>>, vector<16x128xf32>
    tpu.vector_store %arg5[%c0_5, %c0_6], %5 {strides = array<i32>} : memref<16x128xf32, #tpu.memory_space<vmem>>, vector<16x128xf32>,
    return
  }
  func.func @transform_0(%arg0: i32, %arg1: i32) -> (i32, i32) {
    %c0_i32 = arith.constant 0 : i32
    %c0_i32_0 = arith.constant 0 : i32
    return %arg0, %c0_i32 : i32, i32
  }
  func.func @transform_1(%arg0: i32, %arg1: i32) -> (i32, i32) {
    %c0_i32 = arith.constant 0 : i32
    %c0_i32_0 = arith.constant 0 : i32
    return %c0_i32, %arg1 : i32, i32
  }
  func.func @transform_2(%arg0: i32, %arg1: i32) -> (i32, i32) {
    %c0_i32 = arith.constant 0 : i32
    %c0_i32_0 = arith.constant 0 : i32
    return %c0_i32, %arg1 : i32, i32
  }
  func.func @transform_3(%arg0: i32, %arg1: i32) -> (i32, i32) {
    %c0_i32 = arith.constant 0 : i32
    return %arg0, %arg1 : i32, i32
  }
}

module attributes {stable_mosaic.version = 11 : i64} {
  func.func @_patch_embed_kernel(%arg0: i32, %arg1: i32, %arg2: memref<16x64xf32, #tpu.memory_space<vmem>>, %arg3: memref<64x128xf32, #tpu.memory_space<vmem>>, %arg4: memref<1x128xf32, #tpu.memory_space<vmem>>, %arg5: memref<16x128xf32, #tpu.memory_space<vmem>>) attributes {dimension_semantics = [#tpu.dimension_semantics<parallel>, #tpu.dimension_semantics<parallel>], iteration_bounds = array<i64: 2, 1>, scalar_prefetch = 0 : i64, scratch_operands = 0 : i64, tpu.core_type = #tpu.core_type<tc>, window_params = [{transform_indices = @transform_0, window_bounds = array<i64: 16, 64>}, {transform_indices = @transform_1, window_bounds = array<i64: 64, 128>}, {transform_indices = @transform_2, window_bounds = array<i64: 1, 128>}, {transform_indices = @transform_3, window_bounds = array<i64: 16, 128>}]} {
    %c0 = arith.constant 0 : index
    %c0_0 = arith.constant 0 : index
    %0 = vector.load %arg2[%c0, %c0_0] : memref<16x64xf32, #tpu.memory_space<vmem>>, vector<16x64xf32>
    %c0_1 = arith.constant 0 : index
    %c0_2 = arith.constant 0 : index
    %1 = vector.load %arg3[%c0_1, %c0_2] : memref<64x128xf32, #tpu.memory_space<vmem>>, vector<64x128xf32>
    %cst = arith.constant dense<0.000000e+00> : vector<16x128xf32>
    %2 = tpu.matmul %0, %1, %cst {dimension_numbers = #tpu.dot_dimension_numbers<[1], [0], [0], [1], [0, 0, 1, 1], [], []>} : vector<16x64xf32>, vector<64x128xf32>, vector<16x128xf32> -> vector<16x128xf32>
    %c0_3 = arith.constant 0 : index
    %c0_4 = arith.constant 0 : index
    %3 = vector.load %arg4[%c0_3, %c0_4] : memref<1x128xf32, #tpu.memory_space<vmem>>, vector<1x128xf32>
    %4 = vector.broadcast %3 : vector<1x128xf32> to vector<16x128xf32>
    %5 = arith.addf %2, %4 : vector<16x128xf32>
    %c0_5 = arith.constant 0 : index
    %c0_6 = arith.constant 0 : index
    %6 = vector.load %arg5[%c0_5, %c0_6] : memref<16x128xf32, #tpu.memory_space<vmem>>, vector<16x128xf32>
    tpu.vector_store %arg5[%c0_5, %c0_6], %5 {strides = array<i32>} : memref<16x128xf32, #tpu.memory_space<vmem>>, vector<16x128xf32>,
    return
  }
  func.func @transform_0(%arg0: i32, %arg1: i32) -> (i32, i32) {
    %c0_i32 = arith.constant 0 : i32
    %c0_i32_0 = arith.constant 0 : i32
    return %arg0, %c0_i32 : i32, i32
  }
  func.func @transform_1(%arg0: i32, %arg1: i32) -> (i32, i32) {
    %c0_i32 = arith.constant 0 : i32
    %c0_i32_0 = arith.constant 0 : i32
    return %c0_i32, %arg1 : i32, i32
  }
  func.func @transform_2(%arg0: i32, %arg1: i32) -> (i32, i32) {
    %c0_i32 = arith.constant 0 : i32
    %c0_i32_0 = arith.constant 0 : i32
    return %c0_i32, %arg1 : i32, i32
  }
  func.func @transform_3(%arg0: i32, %arg1: i32) -> (i32, i32) {
    %c0_i32 = arith.constant 0 : i32
    return %arg0, %arg1 : i32, i32
  }
}

</mosaic_0001>

<llo_original>
// kernel: tpu_custom_call.1
$region0: #{tpu_custom_call.1}
  #allocation0 [shape = 'u32[]', space=smem, size = 0x4, offset = 0x4, fixed_abs, tag = 'smem constant byte address 0x4 - core index']
  #allocation1 [shape = 'u32[144,128]{1,0:T(1,128)}', space=vmem, size = 0x12000, scoped, tag = 'internal scratch']
  %s0 = inlined_call_operand.hbm [shape: f32[32,64], index: 0, kind: input, shape index: {}]
  %s1 = inlined_call_operand.hbm [shape: f32[64,128], index: 1, kind: input, shape index: {}]
  %s2 = inlined_call_operand.vmem [shape: f32[1,128], index: 2, kind: input, shape index: {}]
  %s3 = inlined_call_operand.hbm [shape: f32[32,128], index: 3, kind: output, shape index: {}]
  %s4 = sld [smem:[#allocation0]]
  $region53: #{tpu_custom_call.1} parent=0
    _
  %s6 = ssub.s32 1, %s4
  %s7 = scalar_select 0, %s6, %s4
  $region1: #{tpu_custom_call.1} parent=0
    #allocation2 [shape = 'u8[16384]{0}', space=vmem, size = 0x4000, scoped, tag = 'input window, operand 0']
    #allocation3 [shape = 's32[2]{0}', space=sflag, size = 0x8, scoped, tag = 'scoped memory for tpu_custom_call.1']
    #allocation4 [shape = 's32[2]{0}', space=sflag, size = 0x8, scoped, tag = 'scoped memory for tpu_custom_call.1']
    #allocation5 [shape = 'u8[32768]{0}', space=vmem, size = 0x8000, scoped, tag = 'input window, operand 1, single buffered']
    #allocation6 [shape = 's32[1]{0}', space=sflag, size = 0x4, scoped, tag = 'scoped memory for tpu_custom_call.1']
    #allocation7 [shape = 'u8[16384]{0}', space=vmem, size = 0x4000, scoped, tag = 'output window, operand 0']
    %8 = vsyncpa [#allocation3], 0
    %s9 = scalar_lea.sflag [#allocation3], 1
    %10 = vsyncpa %s9, 0
    %11 = vsyncpa [#allocation6], 0
    %12 = vsyncpa [#allocation4], 0
    %s13 = scalar_lea.sflag [#allocation4], 1
    %14 = vsyncpa %s13, 0
    loop: start=0, step=1, limit=4
    $region2: #{tpu_custom_call.1} parent=1 // loop_pre_header
      _
    $region3: #{tpu_custom_call.1} parent=1 // loop_header
      %s16 = sphi 0, %s20
      %p17 = scmp.ge.s32.totalorder %s16, 4
      %s23 = sphi 0, %s35
      %s24 = sphi 0, %s31
      %s25 = sphi 0, %s23
      %s26 = sphi 0, %s24
      %s27 = sphi 0, %s25
      %s28 = sphi 0, %s26
      %s38 = sphi 0, %s40
      %s41 = sphi 0, %s38
      %s42 = sphi 0, %s41
      %s58 = sphi 0, %s42
      %s64 = sphi 0, %s66
      %s67 = sphi 0, %s64
      %s68 = sphi 0, %s67
      %s84 = sphi 0, %s68
      %s90 = sphi 0, %s92
      %s93 = sphi 0, %s90
      %s94 = sphi 0, %s93
      %s110 = sphi 0, %s94
      %s118 = sphi 0, %s120
      %s121 = sphi 0, %s118
      %s122 = sphi 0, %s121
      %s138 = sphi 0, %s122
    $region4: #{tpu_custom_call.1} parent=1 // loop_header_branch
      %19 = sbr.rel (%p17) target = $region8
    $region5: #{tpu_custom_call.1} parent=1 // loop_body
      %s21 = ssub.s32 %s16, 1
      %s22 = ssub.s32 %s16, 2
      %s29 = sadd.s32 1, %s24
      %p30 = scmp.ge.s32.totalorder %s29, 1
      %s31 = scalar_select %p30, 0, %s29
      %s32 = sadd.s32 1, %s23
      %s33 = scalar_select %p30, %s32, %s23
      %p34 = scmp.ge.s32.totalorder %s33, 2
      %s35 = scalar_select %p34, 0, %s33
      %s36 = ssub.s32 %s23, %s35
      %p37 = scmp.eq.s32.totalorder %s36, 0
      %s39 = sadd.s32 %s38, 1
      %s40 = scalar_select %p37, %s38, %s39
      %p43 = pneg %p37
      %p44 = scmp.eq.s32.totalorder %s16, 1
      %p45 = por %p43, %p44
      %p46 = scmp.ne.s32.totalorder %s38, %s41
      %p47 = scmp.eq.s32.totalorder %s16, 0
      %p48 = por %p46, %p47
      %p49 = scmp.ne.s32.totalorder %s38, %s41
      %p50 = scmp.eq.s32.totalorder %s21, 1
      %p51 = por %p49, %p50
      %p52 = scmp.ne.s32.totalorder %s41, %s42
      %p53 = scmp.eq.s32.totalorder %s21, 0
      %p54 = por %p52, %p53
      %p55 = scmp.ne.s32.totalorder %s41, %s42
      %p56 = scmp.eq.s32.totalorder %s22, 1
      %p57 = por %p55, %p56
      %p59 = scmp.ne.s32.totalorder %s42, %s58
      %p60 = scmp.eq.s32.totalorder %s22, 0
      %p61 = por %p59, %p60
      %s62 = ssub.s32 %s24, %s31
      %p63 = scmp.eq.s32.totalorder %s62, 0
      %s65 = sadd.s32 %s64, 1
      %s66 = scalar_select %p63, %s64, %s65
      %p69 = pneg %p63
      %p70 = scmp.eq.s32.totalorder %s16, 1
      %p71 = por %p69, %p70
      %p72 = scmp.ne.s32.totalorder %s64, %s67
      %p73 = scmp.eq.s32.totalorder %s16, 0
      %p74 = por %p72, %p73
      %p75 = scmp.ne.s32.totalorder %s64, %s67
      %p76 = scmp.eq.s32.totalorder %s21, 1
      %p77 = por %p75, %p76
      %p78 = scmp.ne.s32.totalorder %s67, %s68
      %p79 = scmp.eq.s32.totalorder %s21, 0
      %p80 = por %p78, %p79
      %p81 = scmp.ne.s32.totalorder %s67, %s68
      %p82 = scmp.eq.s32.totalorder %s22, 1
      %p83 = por %p81, %p82
      %p85 = scmp.ne.s32.totalorder %s68, %s84
      %p86 = scmp.eq.s32.totalorder %s22, 0
      %p87 = por %p85, %p86
      %s88 = ssub.s32 %s24, %s31
      %p89 = scmp.eq.s32.totalorder %s88, 0
      %s91 = sadd.s32 %s90, 1
      %s92 = scalar_select %p89, %s90, %s91
      %p95 = pneg %p89
      %p96 = scmp.eq.s32.totalorder %s16, 1
      %p97 = por %p95, %p96
      %p98 = scmp.ne.s32.totalorder %s90, %s93
      %p99 = scmp.eq.s32.totalorder %s16, 0
      %p100 = por %p98, %p99
      %p101 = scmp.ne.s32.totalorder %s90, %s93
      %p102 = scmp.eq.s32.totalorder %s21, 1
      %p103 = por %p101, %p102
      %p104 = scmp.ne.s32.totalorder %s93, %s94
      %p105 = scmp.eq.s32.totalorder %s21, 0
      %p106 = por %p104, %p105
      %p107 = scmp.ne.s32.totalorder %s93, %s94
      %p108 = scmp.eq.s32.totalorder %s22, 1
      %p109 = por %p107, %p108
      %p111 = scmp.ne.s32.totalorder %s94, %s110
      %p112 = scmp.eq.s32.totalorder %s22, 0
      %p113 = por %p111, %p112
      %s114 = ssub.s32 %s23, %s35
      %s115 = ssub.s32 %s24, %s31
      %s116 = sor.u32 %s114, %s115
      %p117 = scmp.eq.s32.totalorder %s116, 0
      %s119 = sadd.s32 %s118, 1
      %s120 = scalar_select %p117, %s118, %s119
      %p123 = pneg %p117
      %p124 = scmp.eq.s32.totalorder %s16, 1
      %p125 = por %p123, %p124
      %p126 = scmp.ne.s32.totalorder %s118, %s121
      %p127 = scmp.eq.s32.totalorder %s16, 0
      %p128 = por %p126, %p127
      %p129 = scmp.ne.s32.totalorder %s118, %s121
      %p130 = scmp.eq.s32.totalorder %s21, 1
      %p131 = por %p129, %p130
      %p132 = scmp.ne.s32.totalorder %s121, %s122
      %p133 = scmp.eq.s32.totalorder %s21, 0
      %p134 = por %p132, %p133
      %p135 = scmp.ne.s32.totalorder %s121, %s122
      %p136 = scmp.eq.s32.totalorder %s22, 1
      %p137 = por %p135, %p136
      %p139 = scmp.ne.s32.totalorder %s122, %s138
      %p140 = scmp.eq.s32.totalorder %s22, 0
      %p141 = por %p139, %p140
      %p142 = scmp.le.s32.totalorder 1, %s16
      %p143 = scmp.lt.s32.totalorder %s16, 3
      %p144 = pnand %p142, %p143
      %p145 = pneg %p144
      // Predicated region
      $region9: #{tpu_custom_call.1} parent=5 // pred_check
        _
      $region10: #{tpu_custom_call.1} parent=5 // pred_check_branch
        %147 = sbr.rel (%p144) target = $region12
      $region11: #{tpu_custom_call.1} parent=5 // pred_region
        %s148 = ssub.s32 %s16, 1
        // Predicated region
        $region13: #{tpu_custom_call.1} parent=11 // pred_check
          %p149 = pneg %p80
        $region14: #{tpu_custom_call.1} parent=11 // pred_check_branch
          %151 = sbr.rel (%p149) target = $region16
        $region15: #{tpu_custom_call.1} parent=11 // pred_region
          %s153 = ssub.s32 1024, 1024
          %154 = vsyncadd [#allocation6], %s153
          %s155 = smul.addr %s26, 128
          %s156 = scalar_lea.hbm %s1, %s155
          %s157 = sshll.u32 [#allocation5], 4
          %s158 = int_to_ptr.vmem [resolvable:$true] %s157
          %163 = dma.hbm_to_vmem [thread:$0]  %s156, 1024, %s158, [#allocation6], 128, 128, 8
        $region16: #{tpu_custom_call.1} parent=11 // pred_fallthru
          _
        // Predicated region
        $region17: #{tpu_custom_call.1} parent=11 // pred_check
          %p164 = pneg %p106
        $region18: #{tpu_custom_call.1} parent=11 // pred_check_branch
          %166 = sbr.rel (%p164) target = $region20
        $region19: #{tpu_custom_call.1} parent=11 // pred_region
          %p167 = scmp.lt.s32.totalorder %s26, 0
          %s168 = scalar_select %p167, %s26, 0
          %s169 = scalar_lea.vmem %s2, %s168
        $region20: #{tpu_custom_call.1} parent=11 // pred_fallthru
          _
      $region12: #{tpu_custom_call.1} parent=5 // pred_fallthru
        _
      %p170 = scmp.lt.s32.totalorder %s16, 2
      // Predicated region
      $region21: #{tpu_custom_call.1} parent=5 // pred_check
        %p171 = pneg %p170
      $region22: #{tpu_custom_call.1} parent=5 // pred_check_branch
        %173 = sbr.rel (%p171) target = $region24
      $region23: #{tpu_custom_call.1} parent=5 // pred_region
        // Predicated region
        $region25: #{tpu_custom_call.1} parent=23 // pred_check
          %p174 = pneg %p48
        $region26: #{tpu_custom_call.1} parent=23 // pred_check_branch
          %176 = sbr.rel (%p174) target = $region28
        $region27: #{tpu_custom_call.1} parent=23 // pred_region
          %s177 = sand.u32 %s38, 1
          %s178 = scalar_lea.sflag [#allocation3], %s177
          %s179 = sand.u32 %s38, 1
          %s180 = smul.addr %s179, 16
          %s181 = scalar_lea.vmem [#allocation2], %s180
          %s182 = smul.u32 2, %s23
          %s184 = ssub.s32 256, 256
          %185 = vsyncadd %s178, %s184
          %s186 = smul.addr %s182, 128
          %s187 = scalar_lea.hbm %s0, %s186
          %s188 = sshll.u32 %s181, 4
          %s189 = int_to_ptr.vmem [resolvable:$true] %s188
          %194 = dma.hbm_to_vmem [thread:$0]  %s187, 256, %s189, %s178, 128, 128, 8
        $region28: #{tpu_custom_call.1} parent=23 // pred_fallthru
          _
      $region24: #{tpu_custom_call.1} parent=5 // pred_fallthru
        _
      %p195 = scmp.le.s32.totalorder 1, %s16
      %p196 = scmp.lt.s32.totalorder %s16, 3
      %p197 = pnand %p195, %p196
      %p198 = pneg %p197
      // Predicated region
      $region29: #{tpu_custom_call.1} parent=5 // pred_check
        _
      $region30: #{tpu_custom_call.1} parent=5 // pred_check_branch
        %200 = sbr.rel (%p197) target = $region32
      $region31: #{tpu_custom_call.1} parent=5 // pred_region
        %s201 = ssub.s32 %s16, 1
        %s202 = sand.u32 %s41, 1
        %s203 = scalar_lea.sflag [#allocation3], %s202
        %s204 = sand.u32 %s41, 1
        %s205 = smul.addr %s204, 16
        %s206 = scalar_lea.vmem [#allocation2], %s205
        // Predicated region
        $region33: #{tpu_custom_call.1} parent=31 // pred_check
          %p207 = pneg %p54
        $region34: #{tpu_custom_call.1} parent=31 // pred_check_branch
          %209 = sbr.rel (%p207) target = $region36
        $region35: #{tpu_custom_call.1} parent=31 // pred_region
          %210 = dma.done %s203, 256
        $region36: #{tpu_custom_call.1} parent=31 // pred_fallthru
          _
        // Predicated region
        $region37: #{tpu_custom_call.1} parent=31 // pred_check
          %p211 = pneg %p80
        $region38: #{tpu_custom_call.1} parent=31 // pred_check_branch
          %213 = sbr.rel (%p211) target = $region40
        $region39: #{tpu_custom_call.1} parent=31 // pred_region
          %214 = dma.done [#allocation6], 1024
        $region40: #{tpu_custom_call.1} parent=31 // pred_fallthru
          _
        %s215 = sand.u32 %s41, 1
        %s216 = scalar_lea.sflag [#allocation3], %s215
        %s217 = sand.u32 %s41, 1
        %s218 = smul.addr %s217, 16
        %s219 = scalar_lea.vmem [#allocation2], %s218
        %p220 = pneg %p54
        %p221 = pneg %p51
        %p222 = pneg %p80
        %p223 = pneg %p77
        %p224 = scmp.lt.s32.totalorder %s26, 0
        %s225 = scalar_select %p224, %s26, 0
        %s226 = scalar_lea.vmem %s2, %s225
        %p227 = pneg %p106
        %p228 = pneg %p103
        %p229 = pneg %p134
        %p230 = pneg %p131
        %s231 = sand.u32 %s121, 1
        %s232 = scalar_lea.sflag [#allocation4], %s231
        %s233 = sand.u32 %s121, 1
        %s234 = smul.addr %s233, 16
        %s235 = scalar_lea.vmem [#allocation7], %s234
        %s236 = smul.u32 2, %s25
        %p237 = scmp.lt.s32.totalorder %s26, 0
        %s238 = scalar_select %p237, %s26, 0
        %s239 = scalar_lea.vmem %s2, %s238
        %s240 = smul.u32 2, %s25
        %v241 = vld [vmem:[%s206] sm:$0xff]
        %v242 = vld [vmem:[%s206 + $0x8] sm:$0xff]
        %v243 = vld [vmem:[#allocation5] sm:$0xff]
        %v244 = vld [vmem:[#allocation5 + $0x8] sm:$0xff]
        %v245 = vld [vmem:[#allocation5 + $0x10] sm:$0xff]
        %v246 = vld [vmem:[#allocation5 + $0x18] sm:$0xff]
        %v247 = vld [vmem:[#allocation5 + $0x20] sm:$0xff]
        %v248 = vld [vmem:[#allocation5 + $0x28] sm:$0xff]
        %v249 = vld [vmem:[#allocation5 + $0x30] sm:$0xff]
        %v250 = vld [vmem:[#allocation5 + $0x38] sm:$0xff]
        %v251 = vld [vmem:[%s239] sm:$0x1]
        %v253 = vlaneseq
        %v254 = vshrl.u32 %v253, 7
        %v255 = vsub.s32 0, %v254
        %v256 = vrot.slane %v251, %v255
        %vm258 = vcmask 523264
        %v260 = vsel %vm258, %v241, 0
        %v263 = vsel %vm258, %v242, 0
        %265 = vmatprep.subr.mxu0 0.0
        %266 = vmatpush1.msra.mxu0 0.0
        %267 = vmatprep.subr.mxu0 0.0
        %268 = vmatpush1.msra.mxu0 0.0
        %269 = vmatprep.subr.mxu0 0.0
        %270 = vmatpush1.msra.mxu0 0.0
        %271 = vmatprep.subr.mxu0 0.0
        %272 = vmatpush1.msra.mxu0 0.0
        %273 = vmatprep.subr.mxu0 0.0
        %274 = vmatpush1.msra.mxu0 0.0
        %275 = vmatprep.subr.mxu0 0.0
        %276 = vmatpush1.msra.mxu0 0.0
        %277 = vmatprep.subr.mxu0 0.0
        %278 = vmatpush1.msra.mxu0 0.0
        %279 = vmatprep.subr.mxu0 0.0
        %280 = vmatpush1.msra.mxu0 0.0
        %281 = vmatprep.subr.mxu0 0.0
        %282 = vmatpush1.msra.mxu0 %v250
        %283 = vmatprep.subr.mxu0 0.0
        %284 = vmatpush1.msra.mxu0 %v249
        %285 = vmatprep.subr.mxu0 0.0
        %286 = vmatpush1.msra.mxu0 %v248
        %287 = vmatprep.subr.mxu0 0.0
        %288 = vmatpush1.msra.mxu0 %v247
        %289 = vmatprep.subr.mxu0 0.0
        %290 = vmatpush1.msra.mxu0 %v246
        %291 = vmatprep.subr.mxu0 0.0
        %292 = vmatpush1.msra.mxu0 %v245
        %293 = vmatprep.subr.mxu0 0.0
        %294 = vmatpush1.msra.mxu0 %v244
        %295 = vmatprep.subr.mxu0 0.0
        %296 = vmatpush1.msra.mxu0 %v243
        %297 = vmatprep.subr.mxu0 0.0
        %298 = vmatpush2.msra.mxu0 0.0
        %299 = vmatprep.subr.mxu0 0.0
        %300 = vmatpush2.msra.mxu0 0.0
        %301 = vmatprep.subr.mxu0 0.0
        %302 = vmatpush2.msra.mxu0 0.0
        %303 = vmatprep.subr.mxu0 0.0
        %304 = vmatpush2.msra.mxu0 0.0
        %305 = vmatprep.subr.mxu0 0.0
        %306 = vmatpush2.msra.mxu0 0.0
        %307 = vmatprep.subr.mxu0 0.0
        %308 = vmatpush2.msra.mxu0 0.0
        %309 = vmatprep.subr.mxu0 0.0
        %310 = vmatpush2.msra.mxu0 0.0
        %311 = vmatprep.subr.mxu0 0.0
        %312 = vmatpush2.msra.mxu0 0.0
        %313 = vmatprep.subr.mxu0 0.0
        %314 = vmatpush2.msra.mxu0 0.0
        %315 = vmatprep.subr.mxu0 0.0
        %316 = vmatpush2.msra.mxu0 0.0
        %317 = vmatprep.subr.mxu0 0.0
        %318 = vmatpush2.msra.mxu0 0.0
        %319 = vmatprep.subr.mxu0 0.0
        %320 = vmatpush2.msra.mxu0 0.0
        %321 = vmatprep.subr.mxu0 0.0
        %322 = vmatpush2.msra.mxu0 0.0
        %323 = vmatprep.subr.mxu0 0.0
        %324 = vmatpush2.msra.mxu0 0.0
        %325 = vmatprep.subr.mxu0 0.0
        %326 = vmatpush2.msra.mxu0 0.0
        %327 = vmatprep.subr.mxu0 0.0
        %328 = vmatpush2.msra.mxu0 0.0
        %329 = vmatprep.mubr.f32.mxu0 0.0
        %330 = vmatmul.mubr.f32.gmra.mxu0 %v260
        %v331 = vpop.f32.mrf.mxu0
        %v332 = vadd.f32 %v256, %v331
        %v333 = vpop.f32.mrf.mxu0
        %334 = vmatprep.mubr.f32.mxu0 0.0
        %335 = vmatmul.mubr.f32.gmra.mxu0 %v263
        %v336 = vpop.f32.mrf.mxu0
        %v337 = vadd.f32 %v256, %v336
        %v338 = vpop.f32.mrf.mxu0
        %339 = vdwg.mxu0
        %340 = vst [vmem:[%s235] sm:$0xff] %v332
        %341 = vst [vmem:[%s235 + $0x8] sm:$0xff] %v337
        %s342 = sand.u32 %s121, 1
        %s343 = scalar_lea.sflag [#allocation4], %s342
        %s344 = sand.u32 %s121, 1
        %s345 = smul.addr %s344, 16
        %s346 = scalar_lea.vmem [#allocation7], %s345
        // Predicated region
        $region41: #{tpu_custom_call.1} parent=31 // pred_check
          %p347 = pneg %p131
        $region42: #{tpu_custom_call.1} parent=31 // pred_check_branch
          %349 = sbr.rel (%p347) target = $region44
        $region43: #{tpu_custom_call.1} parent=31 // pred_region
          %s350 = smul.u32 2, %s25
          %s352 = ssub.s32 256, 256
          %353 = vsyncadd %s343, %s352
          %s354 = sadd.s32 %s26, %s350
          %s355 = smul.addr %s354, 128
          %s356 = scalar_lea.hbm %s3, %s355
          %s357 = sshll.u32 %s346, 4
          %s358 = int_to_ptr.vmem [resolvable:$true] %s357
          %363 = dma.vmem_to_hbm [thread:$0]  %s358, 256, %s356, %s343, 128, 128, 8
        $region44: #{tpu_custom_call.1} parent=31 // pred_fallthru
          _
      $region32: #{tpu_custom_call.1} parent=5 // pred_fallthru
        _
      %p364 = scmp.le.s32.totalorder 2, %s16
      // Predicated region
      $region45: #{tpu_custom_call.1} parent=5 // pred_check
        %p365 = pneg %p364
      $region46: #{tpu_custom_call.1} parent=5 // pred_check_branch
        %367 = sbr.rel (%p365) target = $region48
      $region47: #{tpu_custom_call.1} parent=5 // pred_region
        %s368 = ssub.s32 %s16, 2
        // Predicated region
        $region49: #{tpu_custom_call.1} parent=47 // pred_check
          %p369 = pneg %p137
        $region50: #{tpu_custom_call.1} parent=47 // pred_check_branch
          %371 = sbr.rel (%p369) target = $region52
        $region51: #{tpu_custom_call.1} parent=47 // pred_region
          %s372 = sand.u32 %s122, 1
          %s373 = scalar_lea.sflag [#allocation4], %s372
          %s374 = sand.u32 %s122, 1
          %s375 = smul.addr %s374, 16
          %s376 = scalar_lea.vmem [#allocation7], %s375
          %377 = dma.done %s373, 256
        $region52: #{tpu_custom_call.1} parent=47 // pred_fallthru
          _
      $region48: #{tpu_custom_call.1} parent=5 // pred_fallthru
        _
    $region6: #{tpu_custom_call.1} parent=1 // loop_footer
      %s20 = sadd.s32 1, %s16
    $region7: #{tpu_custom_call.1} parent=1 // loop_footer_branch
      %15 = sbr.rel target = $region3
    $region8: #{tpu_custom_call.1} parent=1 // loop_exit
      _
    %378 = vsyncpa [#allocation3], 1
    %s379 = scalar_lea.sflag [#allocation3], 1
    %380 = vsyncpa %s379, 1
    %381 = vsyncpa [#allocation6], 1
    %382 = vsyncpa [#allocation4], 1
    %s383 = scalar_lea.sflag [#allocation4], 1
    %384 = vsyncpa %s383, 1

// kernel: tpu_custom_call.1
$region0: #{tpu_custom_call.1}
  #allocation0 [shape = 'u32[]', space=smem, size = 0x4, offset = 0x4, fixed_abs, tag = 'smem constant byte address 0x4 - core index']
  #allocation1 [shape = 'u32[144,128]{1,0:T(1,128)}', space=vmem, size = 0x12000, scoped, tag = 'internal scratch']
  %s0 = inlined_call_operand.hbm [shape: f32[32,64], index: 0, kind: input, shape index: {}]
  %s1 = inlined_call_operand.hbm [shape: f32[64,128], index: 1, kind: input, shape index: {}]
  %s2 = inlined_call_operand.vmem [shape: f32[1,128], index: 2, kind: input, shape index: {}]
  %s3 = inlined_call_operand.hbm [shape: f32[32,128], index: 3, kind: output, shape index: {}]
  %s4 = sld [smem:[#allocation0]]
  $region53: #{tpu_custom_call.1} parent=0
    _
  %s6 = ssub.s32 1, %s4
  %s7 = scalar_select 0, %s6, %s4
  $region1: #{tpu_custom_call.1} parent=0
    #allocation2 [shape = 'u8[16384]{0}', space=vmem, size = 0x4000, scoped, tag = 'input window, operand 0']
    #allocation3 [shape = 's32[2]{0}', space=sflag, size = 0x8, scoped, tag = 'scoped memory for tpu_custom_call.1']
    #allocation4 [shape = 's32[2]{0}', space=sflag, size = 0x8, scoped, tag = 'scoped memory for tpu_custom_call.1']
    #allocation5 [shape = 'u8[32768]{0}', space=vmem, size = 0x8000, scoped, tag = 'input window, operand 1, single buffered']
    #allocation6 [shape = 's32[1]{0}', space=sflag, size = 0x4, scoped, tag = 'scoped memory for tpu_custom_call.1']
    #allocation7 [shape = 'u8[16384]{0}', space=vmem, size = 0x4000, scoped, tag = 'output window, operand 0']
    %8 = vsyncpa [#allocation3], 0
    %s9 = scalar_lea.sflag [#allocation3], 1
    %10 = vsyncpa %s9, 0
    %11 = vsyncpa [#allocation6], 0
    %12 = vsyncpa [#allocation4], 0
    %s13 = scalar_lea.sflag [#allocation4], 1
    %14 = vsyncpa %s13, 0
    loop: start=0, step=1, limit=4
    $region2: #{tpu_custom_call.1} parent=1 // loop_pre_header
      _
    $region3: #{tpu_custom_call.1} parent=1 // loop_header
      %s16 = sphi 0, %s20
      %p17 = scmp.ge.s32.totalorder %s16, 4
      %s23 = sphi 0, %s35
      %s24 = sphi 0, %s31
      %s25 = sphi 0, %s23
      %s26 = sphi 0, %s24
      %s27 = sphi 0, %s25
      %s28 = sphi 0, %s26
      %s38 = sphi 0, %s40
      %s41 = sphi 0, %s38
      %s42 = sphi 0, %s41
      %s58 = sphi 0, %s42
      %s64 = sphi 0, %s66
      %s67 = sphi 0, %s64
      %s68 = sphi 0, %s67
      %s84 = sphi 0, %s68
      %s90 = sphi 0, %s92
      %s93 = sphi 0, %s90
      %s94 = sphi 0, %s93
      %s110 = sphi 0, %s94
      %s118 = sphi 0, %s120
      %s121 = sphi 0, %s118
      %s122 = sphi 0, %s121
      %s138 = sphi 0, %s122
    $region4: #{tpu_custom_call.1} parent=1 // loop_header_branch
      %19 = sbr.rel (%p17) target = $region8
    $region5: #{tpu_custom_call.1} parent=1 // loop_body
      %s21 = ssub.s32 %s16, 1
      %s22 = ssub.s32 %s16, 2
      %s29 = sadd.s32 1, %s24
      %p30 = scmp.ge.s32.totalorder %s29, 1
      %s31 = scalar_select %p30, 0, %s29
      %s32 = sadd.s32 1, %s23
      %s33 = scalar_select %p30, %s32, %s23
      %p34 = scmp.ge.s32.totalorder %s33, 2
      %s35 = scalar_select %p34, 0, %s33
      %s36 = ssub.s32 %s23, %s35
      %p37 = scmp.eq.s32.totalorder %s36, 0
      %s39 = sadd.s32 %s38, 1
      %s40 = scalar_select %p37, %s38, %s39
      %p43 = pneg %p37
      %p44 = scmp.eq.s32.totalorder %s16, 1
      %p45 = por %p43, %p44
      %p46 = scmp.ne.s32.totalorder %s38, %s41
      %p47 = scmp.eq.s32.totalorder %s16, 0
      %p48 = por %p46, %p47
      %p49 = scmp.ne.s32.totalorder %s38, %s41
      %p50 = scmp.eq.s32.totalorder %s21, 1
      %p51 = por %p49, %p50
      %p52 = scmp.ne.s32.totalorder %s41, %s42
      %p53 = scmp.eq.s32.totalorder %s21, 0
      %p54 = por %p52, %p53
      %p55 = scmp.ne.s32.totalorder %s41, %s42
      %p56 = scmp.eq.s32.totalorder %s22, 1
      %p57 = por %p55, %p56
      %p59 = scmp.ne.s32.totalorder %s42, %s58
      %p60 = scmp.eq.s32.totalorder %s22, 0
      %p61 = por %p59, %p60
      %s62 = ssub.s32 %s24, %s31
      %p63 = scmp.eq.s32.totalorder %s62, 0
      %s65 = sadd.s32 %s64, 1
      %s66 = scalar_select %p63, %s64, %s65
      %p69 = pneg %p63
      %p70 = scmp.eq.s32.totalorder %s16, 1
      %p71 = por %p69, %p70
      %p72 = scmp.ne.s32.totalorder %s64, %s67
      %p73 = scmp.eq.s32.totalorder %s16, 0
      %p74 = por %p72, %p73
      %p75 = scmp.ne.s32.totalorder %s64, %s67
      %p76 = scmp.eq.s32.totalorder %s21, 1
      %p77 = por %p75, %p76
      %p78 = scmp.ne.s32.totalorder %s67, %s68
      %p79 = scmp.eq.s32.totalorder %s21, 0
      %p80 = por %p78, %p79
      %p81 = scmp.ne.s32.totalorder %s67, %s68
      %p82 = scmp.eq.s32.totalorder %s22, 1
      %p83 = por %p81, %p82
      %p85 = scmp.ne.s32.totalorder %s68, %s84
      %p86 = scmp.eq.s32.totalorder %s22, 0
      %p87 = por %p85, %p86
      %s88 = ssub.s32 %s24, %s31
      %p89 = scmp.eq.s32.totalorder %s88, 0
      %s91 = sadd.s32 %s90, 1
      %s92 = scalar_select %p89, %s90, %s91
      %p95 = pneg %p89
      %p96 = scmp.eq.s32.totalorder %s16, 1
      %p97 = por %p95, %p96
      %p98 = scmp.ne.s32.totalorder %s90, %s93
      %p99 = scmp.eq.s32.totalorder %s16, 0
      %p100 = por %p98, %p99
      %p101 = scmp.ne.s32.totalorder %s90, %s93
      %p102 = scmp.eq.s32.totalorder %s21, 1
      %p103 = por %p101, %p102
      %p104 = scmp.ne.s32.totalorder %s93, %s94
      %p105 = scmp.eq.s32.totalorder %s21, 0
      %p106 = por %p104, %p105
      %p107 = scmp.ne.s32.totalorder %s93, %s94
      %p108 = scmp.eq.s32.totalorder %s22, 1
      %p109 = por %p107, %p108
      %p111 = scmp.ne.s32.totalorder %s94, %s110
      %p112 = scmp.eq.s32.totalorder %s22, 0
      %p113 = por %p111, %p112
      %s114 = ssub.s32 %s23, %s35
      %s115 = ssub.s32 %s24, %s31
      %s116 = sor.u32 %s114, %s115
      %p117 = scmp.eq.s32.totalorder %s116, 0
      %s119 = sadd.s32 %s118, 1
      %s120 = scalar_select %p117, %s118, %s119
      %p123 = pneg %p117
      %p124 = scmp.eq.s32.totalorder %s16, 1
      %p125 = por %p123, %p124
      %p126 = scmp.ne.s32.totalorder %s118, %s121
      %p127 = scmp.eq.s32.totalorder %s16, 0
      %p128 = por %p126, %p127
      %p129 = scmp.ne.s32.totalorder %s118, %s121
      %p130 = scmp.eq.s32.totalorder %s21, 1
      %p131 = por %p129, %p130
      %p132 = scmp.ne.s32.totalorder %s121, %s122
      %p133 = scmp.eq.s32.totalorder %s21, 0
      %p134 = por %p132, %p133
      %p135 = scmp.ne.s32.totalorder %s121, %s122
      %p136 = scmp.eq.s32.totalorder %s22, 1
      %p137 = por %p135, %p136
      %p139 = scmp.ne.s32.totalorder %s122, %s138
      %p140 = scmp.eq.s32.totalorder %s22, 0
      %p141 = por %p139, %p140
      %p142 = scmp.le.s32.totalorder 1, %s16
      %p143 = scmp.lt.s32.totalorder %s16, 3
      %p144 = pnand %p142, %p143
      %p145 = pneg %p144
      // Predicated region
      $region9: #{tpu_custom_call.1} parent=5 // pred_check
        _
      $region10: #{tpu_custom_call.1} parent=5 // pred_check_branch
        %147 = sbr.rel (%p144) target = $region12
      $region11: #{tpu_custom_call.1} parent=5 // pred_region
        %s148 = ssub.s32 %s16, 1
        // Predicated region
        $region13: #{tpu_custom_call.1} parent=11 // pred_check
          %p149 = pneg %p80
        $region14: #{tpu_custom_call.1} parent=11 // pred_check_branch
          %151 = sbr.rel (%p149) target = $region16
        $region15: #{tpu_custom_call.1} parent=11 // pred_region
          %s153 = ssub.s32 1024, 1024
          %154 = vsyncadd [#allocation6], %s153
          %s155 = smul.addr %s26, 128
          %s156 = scalar_lea.hbm %s1, %s155
          %s157 = sshll.u32 [#allocation5], 4
          %s158 = int_to_ptr.vmem [resolvable:$true] %s157
          %163 = dma.hbm_to_vmem [thread:$0]  %s156, 1024, %s158, [#allocation6], 128, 128, 8
        $region16: #{tpu_custom_call.1} parent=11 // pred_fallthru
          _
        // Predicated region
        $region17: #{tpu_custom_call.1} parent=11 // pred_check
          %p164 = pneg %p106
        $region18: #{tpu_custom_call.1} parent=11 // pred_check_branch
          %166 = sbr.rel (%p164) target = $region20
        $region19: #{tpu_custom_call.1} parent=11 // pred_region
          %p167 = scmp.lt.s32.totalorder %s26, 0
          %s168 = scalar_select %p167, %s26, 0
          %s169 = scalar_lea.vmem %s2, %s168
        $region20: #{tpu_custom_call.1} parent=11 // pred_fallthru
          _
      $region12: #{tpu_custom_call.1} parent=5 // pred_fallthru
        _
      %p170 = scmp.lt.s32.totalorder %s16, 2
      // Predicated region
      $region21: #{tpu_custom_call.1} parent=5 // pred_check
        %p171 = pneg %p170
      $region22: #{tpu_custom_call.1} parent=5 // pred_check_branch
        %173 = sbr.rel (%p171) target = $region24
      $region23: #{tpu_custom_call.1} parent=5 // pred_region
        // Predicated region
        $region25: #{tpu_custom_call.1} parent=23 // pred_check
          %p174 = pneg %p48
        $region26: #{tpu_custom_call.1} parent=23 // pred_check_branch
          %176 = sbr.rel (%p174) target = $region28
        $region27: #{tpu_custom_call.1} parent=23 // pred_region
          %s177 = sand.u32 %s38, 1
          %s178 = scalar_lea.sflag [#allocation3], %s177
          %s179 = sand.u32 %s38, 1
          %s180 = smul.addr %s179, 16
          %s181 = scalar_lea.vmem [#allocation2], %s180
          %s182 = smul.u32 2, %s23
          %s184 = ssub.s32 256, 256
          %185 = vsyncadd %s178, %s184
          %s186 = smul.addr %s182, 128
          %s187 = scalar_lea.hbm %s0, %s186
          %s188 = sshll.u32 %s181, 4
          %s189 = int_to_ptr.vmem [resolvable:$true] %s188
          %194 = dma.hbm_to_vmem [thread:$0]  %s187, 256, %s189, %s178, 128, 128, 8
        $region28: #{tpu_custom_call.1} parent=23 // pred_fallthru
          _
      $region24: #{tpu_custom_call.1} parent=5 // pred_fallthru
        _
      %p195 = scmp.le.s32.totalorder 1, %s16
      %p196 = scmp.lt.s32.totalorder %s16, 3
      %p197 = pnand %p195, %p196
      %p198 = pneg %p197
      // Predicated region
      $region29: #{tpu_custom_call.1} parent=5 // pred_check
        _
      $region30: #{tpu_custom_call.1} parent=5 // pred_check_branch
        %200 = sbr.rel (%p197) target = $region32
      $region31: #{tpu_custom_call.1} parent=5 // pred_region
        %s201 = ssub.s32 %s16, 1
        %s202 = sand.u32 %s41, 1
        %s203 = scalar_lea.sflag [#allocation3], %s202
        %s204 = sand.u32 %s41, 1
        %s205 = smul.addr %s204, 16
        %s206 = scalar_lea.vmem [#allocation2], %s205
        // Predicated region
        $region33: #{tpu_custom_call.1} parent=31 // pred_check
          %p207 = pneg %p54
        $region34: #{tpu_custom_call.1} parent=31 // pred_check_branch
          %209 = sbr.rel (%p207) target = $region36
        $region35: #{tpu_custom_call.1} parent=31 // pred_region
          %210 = dma.done %s203, 256
        $region36: #{tpu_custom_call.1} parent=31 // pred_fallthru
          _
        // Predicated region
        $region37: #{tpu_custom_call.1} parent=31 // pred_check
          %p211 = pneg %p80
        $region38: #{tpu_custom_call.1} parent=31 // pred_check_branch
          %213 = sbr.rel (%p211) target = $region40
        $region39: #{tpu_custom_call.1} parent=31 // pred_region
          %214 = dma.done [#allocation6], 1024
        $region40: #{tpu_custom_call.1} parent=31 // pred_fallthru
          _
        %s215 = sand.u32 %s41, 1
        %s216 = scalar_lea.sflag [#allocation3], %s215
        %s217 = sand.u32 %s41, 1
        %s218 = smul.addr %s217, 16
        %s219 = scalar_lea.vmem [#allocation2], %s218
        %p220 = pneg %p54
        %p221 = pneg %p51
        %p222 = pneg %p80
        %p223 = pneg %p77
        %p224 = scmp.lt.s32.totalorder %s26, 0
        %s225 = scalar_select %p224, %s26, 0
        %s226 = scalar_lea.vmem %s2, %s225
        %p227 = pneg %p106
        %p228 = pneg %p103
        %p229 = pneg %p134
        %p230 = pneg %p131
        %s231 = sand.u32 %s121, 1
        %s232 = scalar_lea.sflag [#allocation4], %s231
        %s233 = sand.u32 %s121, 1
        %s234 = smul.addr %s233, 16
        %s235 = scalar_lea.vmem [#allocation7], %s234
        %s236 = smul.u32 2, %s25
        %p237 = scmp.lt.s32.totalorder %s26, 0
        %s238 = scalar_select %p237, %s26, 0
        %s239 = scalar_lea.vmem %s2, %s238
        %s240 = smul.u32 2, %s25
        %v241 = vld [vmem:[%s206] sm:$0xff]
        %v242 = vld [vmem:[%s206 + $0x8] sm:$0xff]
        %v243 = vld [vmem:[#allocation5] sm:$0xff]
        %v244 = vld [vmem:[#allocation5 + $0x8] sm:$0xff]
        %v245 = vld [vmem:[#allocation5 + $0x10] sm:$0xff]
        %v246 = vld [vmem:[#allocation5 + $0x18] sm:$0xff]
        %v247 = vld [vmem:[#allocation5 + $0x20] sm:$0xff]
        %v248 = vld [vmem:[#allocation5 + $0x28] sm:$0xff]
        %v249 = vld [vmem:[#allocation5 + $0x30] sm:$0xff]
        %v250 = vld [vmem:[#allocation5 + $0x38] sm:$0xff]
        %v251 = vld [vmem:[%s239] sm:$0x1]
        %v253 = vlaneseq
        %v254 = vshrl.u32 %v253, 7
        %v255 = vsub.s32 0, %v254
        %v256 = vrot.slane %v251, %v255
        %vm258 = vcmask 523264
        %v260 = vsel %vm258, %v241, 0
        %v263 = vsel %vm258, %v242, 0
        %265 = vmatprep.subr.mxu0 0.0
        %266 = vmatpush1.msra.mxu0 0.0
        %267 = vmatprep.subr.mxu0 0.0
        %268 = vmatpush1.msra.mxu0 0.0
        %269 = vmatprep.subr.mxu0 0.0
        %270 = vmatpush1.msra.mxu0 0.0
        %271 = vmatprep.subr.mxu0 0.0
        %272 = vmatpush1.msra.mxu0 0.0
        %273 = vmatprep.subr.mxu0 0.0
        %274 = vmatpush1.msra.mxu0 0.0
        %275 = vmatprep.subr.mxu0 0.0
        %276 = vmatpush1.msra.mxu0 0.0
        %277 = vmatprep.subr.mxu0 0.0
        %278 = vmatpush1.msra.mxu0 0.0
        %279 = vmatprep.subr.mxu0 0.0
        %280 = vmatpush1.msra.mxu0 0.0
        %281 = vmatprep.subr.mxu0 0.0
        %282 = vmatpush1.msra.mxu0 %v250
        %283 = vmatprep.subr.mxu0 0.0
        %284 = vmatpush1.msra.mxu0 %v249
        %285 = vmatprep.subr.mxu0 0.0
        %286 = vmatpush1.msra.mxu0 %v248
        %287 = vmatprep.subr.mxu0 0.0
        %288 = vmatpush1.msra.mxu0 %v247
        %289 = vmatprep.subr.mxu0 0.0
        %290 = vmatpush1.msra.mxu0 %v246
        %291 = vmatprep.subr.mxu0 0.0
        %292 = vmatpush1.msra.mxu0 %v245
        %293 = vmatprep.subr.mxu0 0.0
        %294 = vmatpush1.msra.mxu0 %v244
        %295 = vmatprep.subr.mxu0 0.0
        %296 = vmatpush1.msra.mxu0 %v243
        %297 = vmatprep.subr.mxu0 0.0
        %298 = vmatpush2.msra.mxu0 0.0
        %299 = vmatprep.subr.mxu0 0.0
        %300 = vmatpush2.msra.mxu0 0.0
        %301 = vmatprep.subr.mxu0 0.0
        %302 = vmatpush2.msra.mxu0 0.0
        %303 = vmatprep.subr.mxu0 0.0
        %304 = vmatpush2.msra.mxu0 0.0
        %305 = vmatprep.subr.mxu0 0.0
        %306 = vmatpush2.msra.mxu0 0.0
        %307 = vmatprep.subr.mxu0 0.0
        %308 = vmatpush2.msra.mxu0 0.0
        %309 = vmatprep.subr.mxu0 0.0
        %310 = vmatpush2.msra.mxu0 0.0
        %311 = vmatprep.subr.mxu0 0.0
        %312 = vmatpush2.msra.mxu0 0.0
        %313 = vmatprep.subr.mxu0 0.0
        %314 = vmatpush2.msra.mxu0 0.0
        %315 = vmatprep.subr.mxu0 0.0
        %316 = vmatpush2.msra.mxu0 0.0
        %317 = vmatprep.subr.mxu0 0.0
        %318 = vmatpush2.msra.mxu0 0.0
        %319 = vmatprep.subr.mxu0 0.0
        %320 = vmatpush2.msra.mxu0 0.0
        %321 = vmatprep.subr.mxu0 0.0
        %322 = vmatpush2.msra.mxu0 0.0
        %323 = vmatprep.subr.mxu0 0.0
        %324 = vmatpush2.msra.mxu0 0.0
        %325 = vmatprep.subr.mxu0 0.0
        %326 = vmatpush2.msra.mxu0 0.0
        %327 = vmatprep.subr.mxu0 0.0
        %328 = vmatpush2.msra.mxu0 0.0
        %329 = vmatprep.mubr.f32.mxu0 0.0
        %330 = vmatmul.mubr.f32.gmra.mxu0 %v260
        %v331 = vpop.f32.mrf.mxu0
        %v332 = vadd.f32 %v256, %v331
        %v333 = vpop.f32.mrf.mxu0
        %334 = vmatprep.mubr.f32.mxu0 0.0
        %335 = vmatmul.mubr.f32.gmra.mxu0 %v263
        %v336 = vpop.f32.mrf.mxu0
        %v337 = vadd.f32 %v256, %v336
        %v338 = vpop.f32.mrf.mxu0
        %339 = vdwg.mxu0
        %340 = vst [vmem:[%s235] sm:$0xff] %v332
        %341 = vst [vmem:[%s235 + $0x8] sm:$0xff] %v337
        %s342 = sand.u32 %s121, 1
        %s343 = scalar_lea.sflag [#allocation4], %s342
        %s344 = sand.u32 %s121, 1
        %s345 = smul.addr %s344, 16
        %s346 = scalar_lea.vmem [#allocation7], %s345
        // Predicated region
        $region41: #{tpu_custom_call.1} parent=31 // pred_check
          %p347 = pneg %p131
        $region42: #{tpu_custom_call.1} parent=31 // pred_check_branch
          %349 = sbr.rel (%p347) target = $region44
        $region43: #{tpu_custom_call.1} parent=31 // pred_region
          %s350 = smul.u32 2, %s25
          %s352 = ssub.s32 256, 256
          %353 = vsyncadd %s343, %s352
          %s354 = sadd.s32 %s26, %s350
          %s355 = smul.addr %s354, 128
          %s356 = scalar_lea.hbm %s3, %s355
          %s357 = sshll.u32 %s346, 4
          %s358 = int_to_ptr.vmem [resolvable:$true] %s357
          %363 = dma.vmem_to_hbm [thread:$0]  %s358, 256, %s356, %s343, 128, 128, 8
        $region44: #{tpu_custom_call.1} parent=31 // pred_fallthru
          _
      $region32: #{tpu_custom_call.1} parent=5 // pred_fallthru
        _
      %p364 = scmp.le.s32.totalorder 2, %s16
      // Predicated region
      $region45: #{tpu_custom_call.1} parent=5 // pred_check
        %p365 = pneg %p364
      $region46: #{tpu_custom_call.1} parent=5 // pred_check_branch
        %367 = sbr.rel (%p365) target = $region48
      $region47: #{tpu_custom_call.1} parent=5 // pred_region
        %s368 = ssub.s32 %s16, 2
        // Predicated region
        $region49: #{tpu_custom_call.1} parent=47 // pred_check
          %p369 = pneg %p137
        $region50: #{tpu_custom_call.1} parent=47 // pred_check_branch
          %371 = sbr.rel (%p369) target = $region52
        $region51: #{tpu_custom_call.1} parent=47 // pred_region
          %s372 = sand.u32 %s122, 1
          %s373 = scalar_lea.sflag [#allocation4], %s372
          %s374 = sand.u32 %s122, 1
          %s375 = smul.addr %s374, 16
          %s376 = scalar_lea.vmem [#allocation7], %s375
          %377 = dma.done %s373, 256
        $region52: #{tpu_custom_call.1} parent=47 // pred_fallthru
          _
      $region48: #{tpu_custom_call.1} parent=5 // pred_fallthru
        _
    $region6: #{tpu_custom_call.1} parent=1 // loop_footer
      %s20 = sadd.s32 1, %s16
    $region7: #{tpu_custom_call.1} parent=1 // loop_footer_branch
      %15 = sbr.rel target = $region3
    $region8: #{tpu_custom_call.1} parent=1 // loop_exit
      _
    %378 = vsyncpa [#allocation3], 1
    %s379 = scalar_lea.sflag [#allocation3], 1
    %380 = vsyncpa %s379, 1
    %381 = vsyncpa [#allocation6], 1
    %382 = vsyncpa [#allocation4], 1
    %s383 = scalar_lea.sflag [#allocation4], 1
    %384 = vsyncpa %s383, 1

</llo_original>
